<compile_context>
chip_gen: v5e
topology: v5e:2x2
jax: 0.10.0
libtpu: 0.0.40
codegen_flags: <defaults>
</compile_context>

<pallas_src>
import jax
import jax.numpy as jnp
import numpy as np
from jax import lax
from jax.experimental import pallas as pl
from jax.experimental.pallas import tpu as pltpu

EPSILON = 1e-8
# Constructor parameters of the PyTorch module that are unused in forward();
# kept for parity.
ALPHA = 0.5
MIN_TURNOVER = 0.001
TURNOVER_WEIGHT = 1000
VOLATILITY_WEIGHT = 0.1
L1_WEIGHT = 0.01

# Byte-based tiling targets: ~2-8 MiB per input block reaches the measured
# ~85%+ of HBM roofline; 2 inputs x 2 pipeline buffers of that size stay well
# inside scoped VMEM on every generation.
_TARGET_BLOCK_BYTES = 4 * 1024 * 1024
_MAX_INFLIGHT_INPUT_BYTES = 24 * 1024 * 1024   # 2 inputs x 2 buffers total


def _cdiv(a, b):
    return -(-a // b)


def _round_up(a, b):
    return _cdiv(a, b) * b


def _choose_tiling(t, n, itemsize, *, tile_t=None, max_chunks=2):
    """Returns (tile_t, tiles_per_chunk, num_chunks, t_pad)."""
    if tile_t is None:
        row_bytes = max(n * itemsize, 1)
        block_bytes = max(min(_TARGET_BLOCK_BYTES, _MAX_INFLIGHT_INPUT_BYTES // 4),
                          8 * row_bytes)
        tile_t = max(8, (block_bytes // row_bytes) // 8 * 8)
        tile_t = min(tile_t, _round_up(t, 8))
        auto = True
    else:
        assert tile_t % 8 == 0, "tile_t must be a multiple of 8 (sublanes)"
        tile_t = min(tile_t, _round_up(t, 8))
        auto = False

    num_tiles = _cdiv(t, tile_t)
    num_chunks = max(1, min(max_chunks, num_tiles))
    num_tiles = num_chunks * _cdiv(num_tiles, num_chunks)
    if auto:
        # Re-balance the tile size so total padding stays <= ~8 rows per tile.
        tile_t = max(8, _round_up(_cdiv(t, num_tiles), 8))
    t_pad = num_tiles * tile_t
    return tile_t, num_tiles // num_chunks, num_chunks, t_pad


def _dpl_kernel(pred_ref, targ_ref, wret_out_ref, turn_out_ref,
                wret_acc, turn_acc, prev_last_ref):
    k = pl.program_id(1)                       # tile index within this chunk

    pred = pred_ref[...].astype(jnp.float32)   # (TT, N)
    targ = targ_ref[...].astype(jnp.float32)   # (TT, N)
    tt = pred.shape[0]
    first_row = pred[0:1, :]
    last_row = pred[tt - 1:tt, :]

    @pl.when(k == 0)
    def _init():
        wret_acc[...] = jnp.zeros_like(wret_acc)
        turn_acc[...] = jnp.zeros_like(turn_acc)
        # Seeding the carry with our own first row zeroes the row-0 boundary
        # term of the first tile of this chunk (chunks are independent).
        prev_last_ref[...] = first_row

    # --- mean weighted return partial --------------------------------------
    # sum_j (pred_ij / ws_i) * targ_ij == (sum_j pred_ij * targ_ij) / ws_i and
    # ws_i >= EPSILON > 0, so the torch.where(...) branch is dead code.
    ws = jnp.sum(jnp.abs(pred), axis=1, keepdims=True) + EPSILON   # (TT, 1)
    rowdot = jnp.sum(pred * targ, axis=1, keepdims=True)           # (TT, 1)
    wret_acc[...] = wret_acc[...] + rowdot / ws

    # --- turnover partial ----------------------------------------------------
    # shifted[j] = pred[j-1] for j>0; row 0 of the rolled tile is replaced by
    # the boundary term against the previous tile's last row (carried in VMEM).
    shifted = pltpu.roll(pred, shift=1, axis=0)
    turn_col = jnp.sum(jnp.abs(pred - shifted), axis=1, keepdims=True)   # (TT,1)
    boundary = jnp.sum(jnp.abs(first_row - prev_last_ref[...]),
                       axis=1, keepdims=True)                           # (1, 1)
    row_ids = lax.broadcasted_iota(jnp.int32, (tt, 1), 0)
    turn_col = jnp.where(row_ids == 0, boundary, turn_col)
    turn_acc[...] = turn_acc[...] + turn_col

    prev_last_ref[...] = last_row

    @pl.when(k == pl.num_programs(1) - 1)
    def _finalize():
        # Single cross-lane/sublane collapse per chunk; lane-dense (1,128)
        # output blocks (unmasked stores).
        wret_out_ref[...] = jnp.full(wret_out_ref.shape,
                                     jnp.sum(wret_acc[...]), jnp.float32)
        turn_out_ref[...] = jnp.full(turn_out_ref.shape,
                                     jnp.sum(turn_acc[...]), jnp.float32)


def dynamic_portfolio_loss(predictions, targets, *, tile_t=None, max_chunks=2):
    """Returns (loss, mean_weighted_return, turnover_penalty) as f32 scalars."""
    assert predictions.shape == targets.shape and predictions.ndim == 2
    t, n = predictions.shape
    itemsize = jnp.dtype(predictions.dtype).itemsize
    tile_t, tiles_per_chunk, num_chunks, t_pad = _choose_tiling(
        t, n, itemsize, tile_t=tile_t, max_chunks=max_chunks)

    # Zero-pad the time axis to a tile multiple (exact: pad rows contribute 0
    # to the weighted return; the |last_real_row - 0| adjacency inside the
    # padded array replaces the reference's trailing zero-row shift term).
    if t_pad != t:
        pad = ((0, t_pad - t), (0, 0))
        pred_pad = jnp.pad(predictions, pad)
        targ_pad = jnp.pad(targets, pad)
    else:
        pred_pad, targ_pad = predictions, targets

    # Explicit VMEM budget: double-buffered inputs + scratch + headroom.
    vmem_bytes = 4 * tile_t * n * itemsize          # 2 inputs x 2 buffers
    vmem_bytes += 2 * tile_t * 128 * 4              # column accumulators (lane padded)
    vmem_bytes += 8 * _round_up(n, 128) * 4         # prev-row carry (padded)
    vmem_bytes += 4 * 8 * 128 * 4                   # per-chunk outputs (padded)
    vmem_bytes += 2 * 1024 * 1024                   # compiler headroom
    vmem_limit = int(min(max(vmem_bytes, 16 * 1024 * 1024), 96 * 1024 * 1024))

    def in_map(c, k):
        return (c * tiles_per_chunk + k, 0)

    wret_parts, turn_parts = pl.pallas_call(
        _dpl_kernel,
        out_shape=(jax.ShapeDtypeStruct((num_chunks, 128), jnp.float32),
                   jax.ShapeDtypeStruct((num_chunks, 128), jnp.float32)),
        grid_spec=pltpu.PrefetchScalarGridSpec(
            num_scalar_prefetch=0,
            grid=(num_chunks, tiles_per_chunk),
            in_specs=[pl.BlockSpec((tile_t, n), in_map),
                      pl.BlockSpec((tile_t, n), in_map)],
            out_specs=[pl.BlockSpec((1, 128), lambda c, k: (c, 0)),
                       pl.BlockSpec((1, 128), lambda c, k: (c, 0))],
            scratch_shapes=[
                pltpu.VMEM((tile_t, 1), jnp.float32),   # weighted-return column acc
                pltpu.VMEM((tile_t, 1), jnp.float32),   # turnover column acc
                pltpu.VMEM((1, n), jnp.float32),        # last row of previous tile
            ]),
        compiler_params=pltpu.CompilerParams(
            dimension_semantics=("parallel", "arbitrary"),
            vmem_limit_bytes=vmem_limit),
    )(pred_pad, targ_pad)

    wret_sum = jnp.sum(wret_parts[:, 0])
    turn_sum = jnp.sum(turn_parts[:, 0])

    # Cross-chunk boundary terms (tiny JAX-side combine; this is what lets the
    # chunk axis be "parallel" and split across v7x's two TensorCores).
    chunk_rows = tiles_per_chunk * tile_t
    if num_chunks > 1:
        prev_rows = pred_pad[chunk_rows - 1:t_pad - 1:chunk_rows].astype(jnp.float32)
        next_rows = pred_pad[chunk_rows:t_pad:chunk_rows].astype(jnp.float32)
        turn_sum = turn_sum + jnp.sum(jnp.abs(prev_rows - next_rows))
    # |last row| vs. the reference's appended zero row.  If we padded, this
    # term is already counted inside the kernel as an adjacent pair.
    if t_pad == t:
        turn_sum = turn_sum + jnp.sum(jnp.abs(predictions[t - 1].astype(jnp.float32)))

    mean_weighted_return = wret_sum / jnp.float32(t)
    turnover_value = turn_sum / jnp.float32(t)
    turnover_penalty = 1.0 / (turnover_value + EPSILON + 0.8) ** 2
    # Matches the reference exactly: divides by the *raw* turnover value, so
    # all-zero predictions give inf/nan just like the PyTorch module.
    loss = -mean_weighted_return / turnover_penalty / turnover_value
    return loss, mean_weighted_return, turnover_penalty


def _reference(predictions, targets):
    """Pure-JAX reference mirroring the PyTorch forward (for sanity check)."""
    p = predictions.astype(jnp.float32)
    tg = targets.astype(jnp.float32)
    ws = jnp.sum(jnp.abs(p), axis=1, keepdims=True) + EPSILON
    w = jnp.where(ws != 0.0, p / ws, jnp.zeros_like(p))
    mwr = jnp.mean(jnp.sum(w * tg, axis=1))
    p_shift = jnp.concatenate([p[1:], jnp.zeros((1, p.shape[1]), p.dtype)], axis=0)
    tv = jnp.mean(jnp.sum(jnp.abs(p - p_shift), axis=1))
    tp = 1.0 / (tv + EPSILON + 0.8) ** 2
    loss = -mwr / tp / tv
    return loss, mwr, tp


if __name__ == "__main__":
    key = jax.random.PRNGKey(0)

    # (T, N), dtype, tile_t override.  Exercises: single-tile path, multi-tile
    # + multi-chunk carry/combine, non-divisible T (zero-padding), bf16 inputs.
    test_cases = [
        ((8, 32), jnp.float32, None),
        ((32, 128), jnp.float32, 8),
        ((37, 96), jnp.float32, 8),
        ((64, 128), jnp.bfloat16, 16),
    ]

    for idx, ((T, N), dtype, tt_override) in enumerate(test_cases):
        k1, k2 = jax.random.split(jax.random.fold_in(key, idx))
        predictions = (jax.random.normal(k1, (T, N), dtype=jnp.float32) * 0.1).astype(dtype)
        targets = (jax.random.normal(k2, (T, N), dtype=jnp.float32) * 0.05).astype(dtype)

        loss, mwr, tp = dynamic_portfolio_loss(predictions, targets, tile_t=tt_override)
        jax.block_until_ready((loss, mwr, tp))

        ref_loss, ref_mwr, ref_tp = _reference(predictions, targets)
        np.testing.assert_allclose(np.asarray(loss), np.asarray(ref_loss),
                                   rtol=1e-4, atol=2e-6)
        np.testing.assert_allclose(np.asarray(mwr), np.asarray(ref_mwr),
                                   rtol=1e-4, atol=2e-6)
        np.testing.assert_allclose(np.asarray(tp), np.asarray(ref_tp),
                                   rtol=1e-4, atol=2e-6)

    print("KERNEL_OK")
</pallas_src>

<mosaic_0001>
module attributes {stable_mosaic.version = 11 : i64} {
  func.func @_dpl_kernel(%arg0: i32, %arg1: i32, %arg2: memref<8x32xf32, #tpu.memory_space<vmem>>, %arg3: memref<8x32xf32, #tpu.memory_space<vmem>>, %arg4: memref<1x128xf32, #tpu.memory_space<vmem>>, %arg5: memref<1x128xf32, #tpu.memory_space<vmem>>, %arg6: memref<8x1xf32, #tpu.memory_space<vmem>>, %arg7: memref<8x1xf32, #tpu.memory_space<vmem>>, %arg8: memref<1x32xf32, #tpu.memory_space<vmem>>) attributes {dimension_semantics = [#tpu.dimension_semantics<parallel>, #tpu.dimension_semantics<arbitrary>], iteration_bounds = array<i64: 1, 1>, scalar_prefetch = 0 : i64, scratch_operands = 3 : i64, tpu.core_type = #tpu.core_type<tc>, window_params = [{transform_indices = @transform_0, window_bounds = array<i64: 8, 32>}, {transform_indices = @transform_1, window_bounds = array<i64: 8, 32>}, {transform_indices = @transform_2, window_bounds = array<i64: 1, 128>}, {transform_indices = @transform_3, window_bounds = array<i64: 1, 128>}]} {
    %c0 = arith.constant 0 : index
    %c0_0 = arith.constant 0 : index
    %0 = vector.load %arg2[%c0, %c0_0] : memref<8x32xf32, #tpu.memory_space<vmem>>, vector<8x32xf32>
    %c0_1 = arith.constant 0 : index
    %c0_2 = arith.constant 0 : index
    %1 = vector.load %arg3[%c0_1, %c0_2] : memref<8x32xf32, #tpu.memory_space<vmem>>, vector<8x32xf32>
    %2 = vector.extract_strided_slice %0 {offsets = [0, 0], sizes = [1, 32], strides = [1, 1]} : vector<8x32xf32> to vector<1x32xf32>
    %3 = vector.extract_strided_slice %0 {offsets = [7, 0], sizes = [1, 32], strides = [1, 1]} : vector<8x32xf32> to vector<1x32xf32>
    %c0_i32 = arith.constant 0 : i32
    %4 = arith.cmpi eq, %arg1, %c0_i32 : i32
    %5 = arith.extui %4 : i1 to i32
    %c0_i32_3 = arith.constant 0 : i32
    %6 = arith.cmpi ne, %5, %c0_i32_3 : i32
    scf.if %6 {
      %cst_23 = arith.constant 0.000000e+00 : f32
      %42 = vector.broadcast %cst_23 : f32 to vector<8x1xf32>
      %c0_24 = arith.constant 0 : index
      %c0_25 = arith.constant 0 : index
      %43 = vector.load %arg6[%c0_24, %c0_25] : memref<8x1xf32, #tpu.memory_space<vmem>>, vector<8x1xf32>
      tpu.vector_store %arg6[%c0_24, %c0_25], %42 {strides = array<i32>} : memref<8x1xf32, #tpu.memory_space<vmem>>, vector<8x1xf32>,
      %cst_26 = arith.constant 0.000000e+00 : f32
      %44 = vector.broadcast %cst_26 : f32 to vector<8x1xf32>
      %c0_27 = arith.constant 0 : index
      %c0_28 = arith.constant 0 : index
      %45 = vector.load %arg7[%c0_27, %c0_28] : memref<8x1xf32, #tpu.memory_space<vmem>>, vector<8x1xf32>
      tpu.vector_store %arg7[%c0_27, %c0_28], %44 {strides = array<i32>} : memref<8x1xf32, #tpu.memory_space<vmem>>, vector<8x1xf32>,
      %c0_29 = arith.constant 0 : index
      %c0_30 = arith.constant 0 : index
      %46 = vector.load %arg8[%c0_29, %c0_30] : memref<1x32xf32, #tpu.memory_space<vmem>>, vector<1x32xf32>
      tpu.vector_store %arg8[%c0_29, %c0_30], %2 {strides = array<i32>} : memref<1x32xf32, #tpu.memory_space<vmem>>, vector<1x32xf32>,
    } else {
    }
    %7 = math.absf %0 : vector<8x32xf32>
    %cst = arith.constant dense<0.000000e+00> : vector<8xf32>
    %8 = vector.multi_reduction <add>, %7, %cst [1] : vector<8x32xf32> to vector<8xf32>
    %9 = vector.shape_cast %8 : vector<8xf32> to vector<8x1xf32>
    %cst_4 = arith.constant 9.99999993E-9 : f32
    %10 = vector.broadcast %cst_4 : f32 to vector<8x1xf32>
    %11 = arith.addf %9, %10 : vector<8x1xf32>
    %12 = arith.mulf %0, %1 : vector<8x32xf32>
    %cst_5 = arith.constant dense<0.000000e+00> : vector<8xf32>
    %13 = vector.multi_reduction <add>, %12, %cst_5 [1] : vector<8x32xf32> to vector<8xf32>
    %14 = vector.shape_cast %13 : vector<8xf32> to vector<8x1xf32>
    %c0_6 = arith.constant 0 : index
    %c0_7 = arith.constant 0 : index
    %15 = vector.load %arg6[%c0_6, %c0_7] : memref<8x1xf32, #tpu.memory_space<vmem>>, vector<8x1xf32>
    %16 = arith.divf %14, %11 : vector<8x1xf32>
    %17 = arith.addf %15, %16 : vector<8x1xf32>
    %c0_8 = arith.constant 0 : index
    %c0_9 = arith.constant 0 : index
    %18 = vector.load %arg6[%c0_8, %c0_9] : memref<8x1xf32, #tpu.memory_space<vmem>>, vector<8x1xf32>
    tpu.vector_store %arg6[%c0_8, %c0_9], %17 {strides = array<i32>} : memref<8x1xf32, #tpu.memory_space<vmem>>, vector<8x1xf32>,
    %c1_i32 = arith.constant 1 : i32
    %19 = tpu.dynamic_rotate %0 by %c1_i32 dim 0 : vector<8x32xf32>, i32 -> vector<8x32xf32>
    %20 = arith.subf %0, %19 : vector<8x32xf32>
    %21 = math.absf %20 : vector<8x32xf32>
    %cst_10 = arith.constant dense<0.000000e+00> : vector<8xf32>
    %22 = vector.multi_reduction <add>, %21, %cst_10 [1] : vector<8x32xf32> to vector<8xf32>
    %23 = vector.shape_cast %22 : vector<8xf32> to vector<8x1xf32>
    %c0_11 = arith.constant 0 : index
    %c0_12 = arith.constant 0 : index
    %24 = vector.load %arg8[%c0_11, %c0_12] : memref<1x32xf32, #tpu.memory_space<vmem>>, vector<1x32xf32>
    %25 = arith.subf %2, %24 : vector<1x32xf32>
    %26 = math.absf %25 : vector<1x32xf32>
    %cst_13 = arith.constant dense<0.000000e+00> : vector<1xf32>
    %27 = vector.multi_reduction <add>, %26, %cst_13 [1] : vector<1x32xf32> to vector<1xf32>
    %28 = vector.shape_cast %27 : vector<1xf32> to vector<1x1xf32>
    %29 = tpu.iota {dimensions = array<i32: 0>} : vector<8x1xi32>
    %c0_i32_14 = arith.constant 0 : i32
    %30 = vector.broadcast %c0_i32_14 : i32 to vector<8x1xi32>
    %31 = arith.cmpi eq, %29, %30 : vector<8x1xi32>
    %32 = vector.shape_cast %28 : vector<1x1xf32> to vector<1x1xf32>
    %33 = vector.broadcast %32 : vector<1x1xf32> to vector<8x1xf32>
    %34 = arith.select %31, %33, %23 : vector<8x1xi1>, vector<8x1xf32>
    %c0_15 = arith.constant 0 : index
    %c0_16 = arith.constant 0 : index
    %35 = vector.load %arg7[%c0_15, %c0_16] : memref<8x1xf32, #tpu.memory_space<vmem>>, vector<8x1xf32>
    %36 = arith.addf %35, %34 : vector<8x1xf32>
    %c0_17 = arith.constant 0 : index
    %c0_18 = arith.constant 0 : index
    %37 = vector.load %arg7[%c0_17, %c0_18] : memref<8x1xf32, #tpu.memory_space<vmem>>, vector<8x1xf32>
    tpu.vector_store %arg7[%c0_17, %c0_18], %36 {strides = array<i32>} : memref<8x1xf32, #tpu.memory_space<vmem>>, vector<8x1xf32>,
    %c0_19 = arith.constant 0 : index
    %c0_20 = arith.constant 0 : index
    %38 = vector.load %arg8[%c0_19, %c0_20] : memref<1x32xf32, #tpu.memory_space<vmem>>, vector<1x32xf32>
    tpu.vector_store %arg8[%c0_19, %c0_20], %3 {strides = array<i32>} : memref<1x32xf32, #tpu.memory_space<vmem>>, vector<1x32xf32>,
    %c0_i32_21 = arith.constant 0 : i32
    %39 = arith.cmpi eq, %arg1, %c0_i32_21 : i32
    %40 = arith.extui %39 : i1 to i32
    %c0_i32_22 = arith.constant 0 : i32
    %41 = arith.cmpi ne, %40, %c0_i32_22 : i32
    scf.if %41 {
      %c0_23 = arith.constant 0 : index
      %c0_24 = arith.constant 0 : index
      %42 = vector.load %arg6[%c0_23, %c0_24] : memref<8x1xf32, #tpu.memory_space<vmem>>, vector<8x1xf32>
      %43 = vector.shape_cast %42 : vector<8x1xf32> to vector<1x8x1xf32>
      %cst_25 = arith.constant dense<0.000000e+00> : vector<1xf32>
      %44 = vector.multi_reduction <add>, %43, %cst_25 [1, 2] : vector<1x8x1xf32> to vector<1xf32>
      %45 = vector.shape_cast %44 : vector<1xf32> to vector<1x1x1xf32>
      %46 = vector.extract %45[0, 0, 0] : f32 from vector<1x1x1xf32>
      %47 = vector.broadcast %46 : f32 to vector<1x128xf32>
      %c0_26 = arith.constant 0 : index
      %c0_27 = arith.constant 0 : index
      %48 = vector.load %arg4[%c0_26, %c0_27] : memref<1x128xf32, #tpu.memory_space<vmem>>, vector<1x128xf32>
      tpu.vector_store %arg4[%c0_26, %c0_27], %47 {strides = array<i32>} : memref<1x128xf32, #tpu.memory_space<vmem>>, vector<1x128xf32>,
      %c0_28 = arith.constant 0 : index
      %c0_29 = arith.constant 0 : index
      %49 = vector.load %arg7[%c0_28, %c0_29] : memref<8x1xf32, #tpu.memory_space<vmem>>, vector<8x1xf32>
      %50 = vector.shape_cast %49 : vector<8x1xf32> to vector<1x8x1xf32>
      %cst_30 = arith.constant dense<0.000000e+00> : vector<1xf32>
      %51 = vector.multi_reduction <add>, %50, %cst_30 [1, 2] : vector<1x8x1xf32> to vector<1xf32>
      %52 = vector.shape_cast %51 : vector<1xf32> to vector<1x1x1xf32>
      %53 = vector.extract %52[0, 0, 0] : f32 from vector<1x1x1xf32>
      %54 = vector.broadcast %53 : f32 to vector<1x128xf32>
      %c0_31 = arith.constant 0 : index
      %c0_32 = arith.constant 0 : index
      %55 = vector.load %arg5[%c0_31, %c0_32] : memref<1x128xf32, #tpu.memory_space<vmem>>, vector<1x128xf32>
      tpu.vector_store %arg5[%c0_31, %c0_32], %54 {strides = array<i32>} : memref<1x128xf32, #tpu.memory_space<vmem>>, vector<1x128xf32>,
    } else {
    }
    return
  }
  func.func @transform_0(%arg0: i32, %arg1: i32) -> (i32, i32) {
    %c1_i32 = arith.constant 1 : i32
    %0 = arith.muli %arg0, %c1_i32 : i32
    %1 = arith.addi %0, %arg1 : i32
    %c0_i32 = arith.constant 0 : i32
    %c0_i32_0 = arith.constant 0 : i32
    return %1, %c0_i32 : i32, i32
  }
  func.func @transform_1(%arg0: i32, %arg1: i32) -> (i32, i32) {
    %c1_i32 = arith.constant 1 : i32
    %0 = arith.muli %arg0, %c1_i32 : i32
    %1 = arith.addi %0, %arg1 : i32
    %c0_i32 = arith.constant 0 : i32
    %c0_i32_0 = arith.constant 0 : i32
    return %1, %c0_i32 : i32, i32
  }
  func.func @transform_2(%arg0: i32, %arg1: i32) -> (i32, i32) {
    %c0_i32 = arith.constant 0 : i32
    %c0_i32_0 = arith.constant 0 : i32
    return %arg0, %c0_i32 : i32, i32
  }
  func.func @transform_3(%arg0: i32, %arg1: i32) -> (i32, i32) {
    %c0_i32 = arith.constant 0 : i32
    %c0_i32_0 = arith.constant 0 : i32
    return %arg0, %c0_i32 : i32, i32
  }
}

</mosaic_0001>

<llo_original>
// kernel: tpu_custom_call.1
$region0: #{tpu_custom_call.1}
  #allocation0 [shape = 'u32[]', space=smem, size = 0x4, offset = 0x4, fixed_abs, tag = 'smem constant byte address 0x4 - core index']
  #allocation1 [shape = 'u32[72,128]{1,0:T(1,128)}', space=vmem, size = 0x9000, scoped, tag = 'internal scratch']
  #allocation2 [shape = 'f32[8,1]{1,0:T(8,128)}', space=vmem, size = 0x1000, scoped, tag = 'scratch operand']
  #allocation3 [shape = 'f32[8,1]{1,0:T(8,128)}', space=vmem, size = 0x1000, scoped, tag = 'scratch operand']
  #allocation4 [shape = 'f32[1,32]{1,0:T(1,128)}', space=vmem, size = 0x200, scoped, tag = 'scratch operand']
  %s0 = inlined_call_operand.hbm [shape: f32[8,32], index: 0, kind: input, shape index: {}]
  %s1 = inlined_call_operand.hbm [shape: f32[8,32], index: 1, kind: input, shape index: {}]
  %s2 = inlined_call_operand.hbm [shape: f32[1,128], index: 2, kind: output, shape index: {0}]
  %s3 = inlined_call_operand.hbm [shape: f32[1,128], index: 3, kind: output, shape index: {1}]
  %4 = xla_tuple %s2, %s3
  %s5 = sld [smem:[#allocation0]]
  $region42: #{tpu_custom_call.1} parent=0
    _
  %s7 = ssub.s32 1, %s5
  %s8 = scalar_select 0, %s7, %s5
  $region1: #{tpu_custom_call.1} parent=0
    #allocation5 [shape = 'u8[4096]{0}', space=vmem, size = 0x1000, scoped, tag = 'input window, operand 0, single buffered']
    #allocation6 [shape = 's32[1]{0}', space=sflag, size = 0x4, scoped, tag = 'scoped memory for tpu_custom_call.1']
    #allocation7 [shape = 's32[1]{0}', space=sflag, size = 0x4, scoped, tag = 'scoped memory for tpu_custom_call.1']
    #allocation8 [shape = 'u8[4096]{0}', space=vmem, size = 0x1000, scoped, tag = 'input window, operand 1, single buffered']
    #allocation9 [shape = 's32[1]{0}', space=sflag, size = 0x4, scoped, tag = 'scoped memory for tpu_custom_call.1']
    #allocation10 [shape = 'u8[512]{0}', space=vmem, size = 0x400, scoped, tag = 'output window, operand 0, single buffered']
    #allocation11 [shape = 'u8[512]{0}', space=vmem, size = 0x400, scoped, tag = 'output window, operand 1, single buffered']
    #allocation12 [shape = 's32[1]{0}', space=sflag, size = 0x4, scoped, tag = 'scoped memory for tpu_custom_call.1']
    %9 = vsyncpa [#allocation6], 0
    %10 = vsyncpa [#allocation9], 0
    %11 = vsyncpa [#allocation7], 0
    %12 = vsyncpa [#allocation12], 0
    // Predicated region
    $region2: #{tpu_custom_call.1} parent=1 // pred_check
      _
    $region3: #{tpu_custom_call.1} parent=1 // pred_check_branch
      %14 = sbr.rel (0) target = $region5
    $region4: #{tpu_custom_call.1} parent=1 // pred_region
      %s15 = sadd.s32 0, 0
      %17 = vsyncadd [#allocation6], 0
      %s18 = smul.addr %s15, 8
      %s19 = scalar_lea.hbm %s0, %s18
      %s21 = sshll.u32 %s19, 4
      %s22 = int_to_ptr.hbm [resolvable:$true] %s21
      %s23 = sshll.u32 [#allocation5], 4
      %s24 = int_to_ptr.vmem [resolvable:$true] %s23
      %26 = dma.hbm_to_vmem [thread:$0]  %s22, 128, %s24, [#allocation6]
    $region5: #{tpu_custom_call.1} parent=1 // pred_fallthru
      _
    // Predicated region
    $region6: #{tpu_custom_call.1} parent=1 // pred_check
      _
    $region7: #{tpu_custom_call.1} parent=1 // pred_check_branch
      %28 = sbr.rel (0) target = $region9
    $region8: #{tpu_custom_call.1} parent=1 // pred_region
      %s29 = sadd.s32 0, 0
      %31 = vsyncadd [#allocation9], 0
      %s32 = smul.addr %s29, 8
      %s33 = scalar_lea.hbm %s1, %s32
      %s35 = sshll.u32 %s33, 4
      %s36 = int_to_ptr.hbm [resolvable:$true] %s35
      %s37 = sshll.u32 [#allocation8], 4
      %s38 = int_to_ptr.vmem [resolvable:$true] %s37
      %40 = dma.hbm_to_vmem [thread:$0]  %s36, 128, %s38, [#allocation9]
    $region9: #{tpu_custom_call.1} parent=1 // pred_fallthru
      _
    // Predicated region
    $region10: #{tpu_custom_call.1} parent=1 // pred_check
      _
    $region11: #{tpu_custom_call.1} parent=1 // pred_check_branch
      %42 = sbr.rel (0) target = $region13
    $region12: #{tpu_custom_call.1} parent=1 // pred_region
      %44 = dma.done [#allocation6], 128
    $region13: #{tpu_custom_call.1} parent=1 // pred_fallthru
      _
    // Predicated region
    $region14: #{tpu_custom_call.1} parent=1 // pred_check
      _
    $region15: #{tpu_custom_call.1} parent=1 // pred_check_branch
      %46 = sbr.rel (0) target = $region17
    $region16: #{tpu_custom_call.1} parent=1 // pred_region
      %48 = dma.done [#allocation9], 128
    $region17: #{tpu_custom_call.1} parent=1 // pred_fallthru
      _
    %s49 = sadd.s32 0, 0
    %s50 = sadd.s32 0, 0
    %v51 = vld [vmem:[#allocation5] sm:$0xff]
    %v52 = vld [vmem:[#allocation8] sm:$0xff]
    %p53 = scmp.eq.s32.totalorder 0, 0
    // Predicated region
    $region18: #{tpu_custom_call.1} parent=1 // pred_check
      %p54 = pneg %p53
    $region19: #{tpu_custom_call.1} parent=1 // pred_check_branch
      %56 = sbr.rel (%p54) target = $region21
    $region20: #{tpu_custom_call.1} parent=1 // pred_region
      %vm57 = vcmask 7168
      %58 = vst.msk [vmem:[#allocation2] sm:$0xff] %vm57, 0.0
      %59 = vst.msk [vmem:[#allocation3] sm:$0xff] %vm57, 0.0
      %vm60 = vcmask 253952
      %61 = vst.msk [vmem:[#allocation4] sm:$0x1] %vm60, %v51
    $region21: #{tpu_custom_call.1} parent=1 // pred_fallthru
      _
    %v62 = vand.u32 2147483647, %v51
    %vm63 = vcmask 261120
    %v64 = vsel %vm63, %v62, 0.0
    %65 = vadd.xlane.f32.xlu0 %v64
    %v66 = vpop.xlane.xlu0 %65
    %v67 = vadd.f32 %v66, 1e-08
    %v68 = vmul.f32 %v51, %v52
    %v69 = vsel %vm63, %v68, 0.0
    %70 = vadd.xlane.f32.xlu0 %v69
    %v71 = vpop.xlane.xlu0 %70
    %v72 = vld [vmem:[#allocation2] sm:$0xff]
    %v73 = vrcp.pop %v67
    %v74 = vmul.f32 %v67, %v73
    %v75 = vsub.f32 1.0, %v74
    %v76 = vmul.f32 %v73, %v75
    %v77 = vadd.f32 %v73, %v76
    %vm78 = vweird.f32 %v67
    %vm79 = vweird.f32 %v73
    %vm80 = vmor %vm78, %vm79
    %v81 = vsel %vm80, %v73, %v77
    %v82 = vand.u32 2147483647, %v67
    %vm83 = vcmp.eq.f32.partialorder %v82, 8.507059e+37
    %v84 = vand.u32 %v67, 2147483648
    %v85 = vor.u32 1.1754944e-38, %v84
    %v86 = vsel %vm83, %v85, %v81
    %v87 = vmul.f32 %v71, %v86
    %v88 = vadd.f32 %v72, %v87
    %vm89 = vcmask 7168
    %90 = vst.msk [vmem:[#allocation2] sm:$0xff] %vm89, %v88
    %v91 = vrot.slane %v51, 7
    %v92 = vsub.f32 %v51, %v91
    %v93 = vand.u32 2147483647, %v92
    %v94 = vsel %vm63, %v93, 0.0
    %95 = vadd.xlane.f32.xlu0 %v94
    %v96 = vpop.xlane.xlu0 %95
    %v97 = vld [vmem:[#allocation4] sm:$0x1]
    %v98 = vsub.f32 %v51, %v97
    %v99 = vand.u32 2147483647, %v98
    %vm100 = vcmask 253952
    %v101 = vsel %vm100, %v99, 0.0
    %102 = vadd.xlane.f32.xlu0 %v101
    %v103 = vpop.xlane.xlu0 %102
    %v104 = vlaneseq
    %v105 = vshrl.u32 %v104, 7
    %vm106 = vcmp.eq.s32.totalorder %v105, 0
    %v107 = vperm.slane %v103, 0
    %v108 = vsel %vm106, %v107, %v96
    %v109 = vld [vmem:[#allocation3] sm:$0xff]
    %v110 = vadd.f32 %v109, %v108
    %111 = vst.msk [vmem:[#allocation3] sm:$0xff] %vm89, %v110
    %vm112 = vcmask 261127
    %113 = vst.msk [vmem:[#allocation4 - $0x7] sm:$0x80] %vm112, %v51
    // Predicated region
    $region22: #{tpu_custom_call.1} parent=1 // pred_check
      %p114 = pneg %p53
    $region23: #{tpu_custom_call.1} parent=1 // pred_check_branch
      %116 = sbr.rel (%p114) target = $region25
    $region24: #{tpu_custom_call.1} parent=1 // pred_region
      %v117 = vld [vmem:[#allocation2] sm:$0xff]
      %v118 = vsel %vm89, %v117, 0.0
      %119 = vadd.xlane.f32.xlu0 %v118
      %v120 = vpop.xlane.xlu0 %119
      %v121 = vrot.slane %v120, 4
      %v122 = vadd.f32 %v120, %v121
      %v123 = vrot.slane %v122, 2
      %v124 = vadd.f32 %v122, %v123
      %v125 = vrot.slane %v124, 1
      %v126 = vadd.f32 %v124, %v125
      %s127 = vtos %v126
      %v128 = vstv %s127
      %129 = vst [vmem:[#allocation10] sm:$0x1] %v128
      %v130 = vld [vmem:[#allocation3] sm:$0xff]
      %v131 = vsel %vm89, %v130, 0.0
      %132 = vadd.xlane.f32.xlu0 %v131
      %v133 = vpop.xlane.xlu0 %132
      %v134 = vrot.slane %v133, 4
      %v135 = vadd.f32 %v133, %v134
      %v136 = vrot.slane %v135, 2
      %v137 = vadd.f32 %v135, %v136
      %v138 = vrot.slane %v137, 1
      %v139 = vadd.f32 %v137, %v138
      %s140 = vtos %v139
      %v141 = vstv %s140
      %142 = vst [vmem:[#allocation11] sm:$0x1] %v141
    $region25: #{tpu_custom_call.1} parent=1 // pred_fallthru
      _
    // Predicated region
    $region26: #{tpu_custom_call.1} parent=1 // pred_check
      _
    $region27: #{tpu_custom_call.1} parent=1 // pred_check_branch
      %144 = sbr.rel (0) target = $region29
    $region28: #{tpu_custom_call.1} parent=1 // pred_region
      %146 = vsyncadd [#allocation7], 0
      %s148 = sshll.u32 [#allocation10], 4
      %s149 = int_to_ptr.vmem [resolvable:$true] %s148
      %s150 = sshll.u32 %s2, 4
      %s151 = int_to_ptr.hbm [resolvable:$true] %s150
      %153 = dma.vmem_to_hbm [thread:$0]  %s149, 16, %s151, [#allocation7]
    $region29: #{tpu_custom_call.1} parent=1 // pred_fallthru
      _
    // Predicated region
    $region30: #{tpu_custom_call.1} parent=1 // pred_check
      _
    $region31: #{tpu_custom_call.1} parent=1 // pred_check_branch
      %155 = sbr.rel (0) target = $region33
    $region32: #{tpu_custom_call.1} parent=1 // pred_region
      %157 = vsyncadd [#allocation12], 0
      %s159 = sshll.u32 [#allocation11], 4
      %s160 = int_to_ptr.vmem [resolvable:$true] %s159
      %s161 = sshll.u32 %s3, 4
      %s162 = int_to_ptr.hbm [resolvable:$true] %s161
      %164 = dma.vmem_to_hbm [thread:$0]  %s160, 16, %s162, [#allocation12]
    $region33: #{tpu_custom_call.1} parent=1 // pred_fallthru
      _
    // Predicated region
    $region34: #{tpu_custom_call.1} parent=1 // pred_check
      _
    $region35: #{tpu_custom_call.1} parent=1 // pred_check_branch
      %166 = sbr.rel (0) target = $region37
    $region36: #{tpu_custom_call.1} parent=1 // pred_region
      %168 = dma.done [#allocation7], 16
    $region37: #{tpu_custom_call.1} parent=1 // pred_fallthru
      _
    // Predicated region
    $region38: #{tpu_custom_call.1} parent=1 // pred_check
      _
    $region39: #{tpu_custom_call.1} parent=1 // pred_check_branch
      %170 = sbr.rel (0) target = $region41
    $region40: #{tpu_custom_call.1} parent=1 // pred_region
      %172 = dma.done [#allocation12], 16
    $region41: #{tpu_custom_call.1} parent=1 // pred_fallthru
      _
    %173 = vsyncpa [#allocation6], 1
    %174 = vsyncpa [#allocation9], 1
    %175 = vsyncpa [#allocation7], 1
    %176 = vsyncpa [#allocation12], 1

</llo_original>
